<compile_context>
chip_gen: v7x
topology: tpu7x:2x2x1
jax: 0.10.0
libtpu: 0.0.40
codegen_flags: <defaults>
</compile_context>

<pallas_src>
import functools

import jax
import jax.numpy as jnp
from jax.experimental import pallas as pl
from jax.experimental.pallas import tpu as pltpu

LANES = 128


def _round_up(v, m):
    return ((v + m - 1) // m) * m


def _dice_bce_kernel(x_ref, t_ref, acc_ref, *, block_rows, tiles_per_core,
                     n_elems, has_pad):
    """One grid step: accumulate per-lane partial sums of
       [sigmoid(x), t, sigmoid(x)*t, bce(x, t)] into acc_ref (1, 4, 8, 128)."""
    i = pl.program_id(1)  # reduction axis (per core)

    @pl.when(i == 0)
    def _():
        acc_ref[...] = jnp.zeros_like(acc_ref)

    x = x_ref[...].astype(jnp.float32)
    t = t_ref[...].astype(jnp.float32)

    # ---- logits-form sigmoid + BCE: one exp, one log, one divide ----
    e = jnp.exp(-jnp.abs(x))                 # exp(-|x|)  in (0, 1]
    log1pe = jnp.log(1.0 + e)                # log(1 + exp(-|x|))
    log_p = jnp.minimum(x, 0.0) - log1pe     # log(sigmoid(x))
    log_1mp = -jnp.maximum(x, 0.0) - log1pe  # log(1 - sigmoid(x))
    # PyTorch F.binary_cross_entropy clamps log terms at -100.
    log_p = jnp.maximum(log_p, -100.0)
    log_1mp = jnp.maximum(log_1mp, -100.0)
    # sigmoid(x): exact division keeps full f32 accuracy (single EUP-class op).
    inv = 1.0 / (1.0 + e)
    p = jnp.where(x >= 0.0, inv, e * inv)
    bce = -(t * log_p + (1.0 - t) * log_1mp)

    if has_pad:
        # Mask out the padded tail (global flat index >= n_elems).
        c = pl.program_id(0)
        tile_idx = c * tiles_per_core + i
        base = tile_idx * (block_rows * LANES)
        row = jax.lax.broadcasted_iota(jnp.int32, (block_rows, LANES), 0)
        lane = jax.lax.broadcasted_iota(jnp.int32, (block_rows, LANES), 1)
        mask = (base + row * LANES + lane) < n_elems
        p = jnp.where(mask, p, 0.0)
        t = jnp.where(mask, t, 0.0)
        bce = jnp.where(mask, bce, 0.0)

    # Fold the whole block to a single (8, 128) vreg with pure VPU adds
    # (layout-preserving reshape; no cross-lane / cross-sublane XLU work here).
    def fold(v):
        return v.reshape(block_rows // 8, 8, LANES).sum(axis=0)

    acc_ref[0, 0, :, :] += fold(p)        # sum sigmoid(x)
    acc_ref[0, 1, :, :] += fold(t)        # sum targets
    acc_ref[0, 2, :, :] += fold(p * t)    # intersection
    acc_ref[0, 3, :, :] += fold(bce)      # sum elementwise BCE


def dice_bce_loss(inputs, targets, smooth=1.0, *, block_rows_cap=2048,
                  num_cores=2):
    """inputs: raw logits (any shape/float dtype), targets: same shape, in [0,1]."""
    n = inputs.size
    x = inputs.reshape(-1)      # no upcast: keep HBM bytes narrow
    t = targets.reshape(-1)

    # Block sizing: as big as possible up to the cap, multiple of 8 rows.
    rows_needed = -(-n // LANES)
    per_core_rows = -(-rows_needed // num_cores)
    block_rows = min(block_rows_cap, _round_up(max(per_core_rows, 8), 8))
    tiles_per_core = -(-rows_needed // (num_cores * block_rows))
    padded_rows = num_cores * tiles_per_core * block_rows
    pad = padded_rows * LANES - n
    has_pad = pad > 0
    if has_pad:
        # Pad with zeros; the in-kernel mask removes their contribution.
        x = jnp.concatenate([x, jnp.zeros((pad,), x.dtype)])
        t = jnp.concatenate([t, jnp.zeros((pad,), t.dtype)])

    x2 = x.reshape(padded_rows, LANES)
    t2 = t.reshape(padded_rows, LANES)

    kernel = functools.partial(
        _dice_bce_kernel,
        block_rows=block_rows,
        tiles_per_core=tiles_per_core,
        n_elems=n,
        has_pad=has_pad,
    )

    partials = pl.pallas_call(
        kernel,
        out_shape=jax.ShapeDtypeStruct((num_cores, 4, 8, LANES), jnp.float32),
        grid_spec=pltpu.PrefetchScalarGridSpec(
            num_scalar_prefetch=0,
            grid=(num_cores, tiles_per_core),
            in_specs=[
                pl.BlockSpec((block_rows, LANES),
                             lambda c, i: (c * tiles_per_core + i, 0)),
                pl.BlockSpec((block_rows, LANES),
                             lambda c, i: (c * tiles_per_core + i, 0)),
            ],
            out_specs=pl.BlockSpec((1, 4, 8, LANES),
                                   lambda c, i: (c, 0, 0, 0)),
        ),
        compiler_params=pltpu.CompilerParams(
            dimension_semantics=("parallel", "arbitrary")),
    )(x2, t2)

    # Tiny epilogue in the wrapper: combine per-core vector partials.
    sums = jnp.sum(partials, axis=(0, 2, 3))      # (4,)
    sum_p, sum_t, sum_pt, sum_bce = sums[0], sums[1], sums[2], sums[3]
    smooth = jnp.float32(smooth)
    dice_loss = 1.0 - (2.0 * sum_pt + smooth) / (sum_p + sum_t + smooth)
    bce_mean = sum_bce / jnp.float32(n)
    return bce_mean + dice_loss


def _reference(inputs, targets, smooth=1.0):
    """Mirror of the PyTorch DiceBCELoss forward (sigmoid + clamped-log BCE)."""
    p = jax.nn.sigmoid(inputs.astype(jnp.float32)).reshape(-1)
    t = targets.astype(jnp.float32).reshape(-1)
    inter = jnp.sum(p * t)
    dice = 1.0 - (2.0 * inter + smooth) / (jnp.sum(p) + jnp.sum(t) + smooth)
    log_p = jnp.maximum(jnp.log(p), -100.0)
    log_1mp = jnp.maximum(jnp.log(1.0 - p), -100.0)
    bce = jnp.mean(-(t * log_p + (1.0 - t) * log_1mp))
    return bce + dice


if __name__ == "__main__":
    key = jax.random.PRNGKey(0)
    k1, k2, k3, k4, k5, k6 = jax.random.split(key, 6)

    # Case 1: aligned NCHW logits / binary targets (no padding path).
    x1 = jax.random.normal(k1, (2, 4, 16, 16), dtype=jnp.float32) * 2.0
    t1 = (jax.random.uniform(k2, (2, 4, 16, 16)) > 0.5).astype(jnp.float32)
    loss1 = jax.block_until_ready(dice_bce_loss(x1, t1, smooth=1.0))
    ref1 = _reference(x1, t1, smooth=1.0)
    assert jnp.allclose(loss1, ref1, rtol=1e-5, atol=1e-5), (loss1, ref1)

    # Case 2: ragged element count -> exercises the in-kernel tail mask.
    x2 = jax.random.normal(k3, (2, 3, 15, 17), dtype=jnp.float32) * 2.0
    t2 = (jax.random.uniform(k4, (2, 3, 15, 17)) > 0.5).astype(jnp.float32)
    loss2 = jax.block_until_ready(dice_bce_loss(x2, t2, smooth=1.0))
    ref2 = _reference(x2, t2, smooth=1.0)
    assert jnp.allclose(loss2, ref2, rtol=1e-5, atol=1e-5), (loss2, ref2)

    # Case 3: small block cap -> exercises multi-tile accumulation over the grid.
    x3 = jax.random.normal(k5, (2, 4, 32, 32), dtype=jnp.float32) * 2.0
    t3 = (jax.random.uniform(k6, (2, 4, 32, 32)) > 0.5).astype(jnp.float32)
    loss3 = jax.block_until_ready(dice_bce_loss(x3, t3, smooth=1.0,
                                                block_rows_cap=8))
    ref3 = _reference(x3, t3, smooth=1.0)
    assert jnp.allclose(loss3, ref3, rtol=1e-5, atol=1e-5), (loss3, ref3)

    print("KERNEL_OK")
</pallas_src>

<mosaic_0001>
module attributes {stable_mosaic.version = 11 : i64} {
  func.func @_dice_bce_kernel(%arg0: i32, %arg1: i32, %arg2: memref<8x128xf32, #tpu.memory_space<vmem>>, %arg3: memref<8x128xf32, #tpu.memory_space<vmem>>, %arg4: memref<1x4x8x128xf32, #tpu.memory_space<vmem>>) attributes {dimension_semantics = [#tpu.dimension_semantics<parallel>, #tpu.dimension_semantics<arbitrary>], iteration_bounds = array<i64: 2, 1>, scalar_prefetch = 0 : i64, scratch_operands = 0 : i64, tpu.core_type = #tpu.core_type<tc>, window_params = [{transform_indices = @transform_0, window_bounds = array<i64: 8, 128>}, {transform_indices = @transform_1, window_bounds = array<i64: 8, 128>}, {transform_indices = @transform_2, window_bounds = array<i64: 1, 4, 8, 128>}]} {
    %c0_i32 = arith.constant 0 : i32
    %0 = arith.cmpi eq, %arg1, %c0_i32 : i32
    %1 = arith.extui %0 : i1 to i32
    %c0_i32_0 = arith.constant 0 : i32
    %2 = arith.cmpi ne, %1, %c0_i32_0 : i32
    scf.if %2 {
      %cst_48 = arith.constant 0.000000e+00 : f32
      %72 = vector.broadcast %cst_48 : f32 to vector<1x4x8x128xf32>
      %c0_49 = arith.constant 0 : index
      %c0_50 = arith.constant 0 : index
      %c0_51 = arith.constant 0 : index
      %c0_52 = arith.constant 0 : index
      %73 = vector.load %arg4[%c0_49, %c0_50, %c0_51, %c0_52] : memref<1x4x8x128xf32, #tpu.memory_space<vmem>>, vector<1x4x8x128xf32>
      tpu.vector_store %arg4[%c0_49, %c0_50, %c0_51, %c0_52], %72 {strides = array<i32>} : memref<1x4x8x128xf32, #tpu.memory_space<vmem>>, vector<1x4x8x128xf32>,
    } else {
    }
    %c0 = arith.constant 0 : index
    %c0_1 = arith.constant 0 : index
    %3 = vector.load %arg2[%c0, %c0_1] : memref<8x128xf32, #tpu.memory_space<vmem>>, vector<8x128xf32>
    %c0_2 = arith.constant 0 : index
    %c0_3 = arith.constant 0 : index
    %4 = vector.load %arg3[%c0_2, %c0_3] : memref<8x128xf32, #tpu.memory_space<vmem>>, vector<8x128xf32>
    %5 = math.absf %3 : vector<8x128xf32>
    %cst = arith.constant 0.000000e+00 : f32
    %6 = vector.broadcast %cst : f32 to vector<8x128xf32>
    %7 = arith.subf %6, %5 : vector<8x128xf32>
    %8 = math.exp %7 : vector<8x128xf32>
    %cst_4 = arith.constant 1.000000e+00 : f32
    %9 = vector.broadcast %cst_4 : f32 to vector<8x128xf32>
    %10 = arith.addf %9, %8 : vector<8x128xf32>
    %11 = math.log %10 : vector<8x128xf32>
    %cst_5 = arith.constant 0.000000e+00 : f32
    %12 = vector.broadcast %cst_5 : f32 to vector<8x128xf32>
    %13 = arith.minimumf %3, %12 : vector<8x128xf32>
    %14 = arith.subf %13, %11 : vector<8x128xf32>
    %cst_6 = arith.constant 0.000000e+00 : f32
    %15 = vector.broadcast %cst_6 : f32 to vector<8x128xf32>
    %16 = arith.maximumf %3, %15 : vector<8x128xf32>
    %cst_7 = arith.constant 0.000000e+00 : f32
    %17 = vector.broadcast %cst_7 : f32 to vector<8x128xf32>
    %18 = arith.subf %17, %16 : vector<8x128xf32>
    %19 = arith.subf %18, %11 : vector<8x128xf32>
    %cst_8 = arith.constant -1.000000e+02 : f32
    %20 = vector.broadcast %cst_8 : f32 to vector<8x128xf32>
    %21 = arith.maximumf %14, %20 : vector<8x128xf32>
    %cst_9 = arith.constant -1.000000e+02 : f32
    %22 = vector.broadcast %cst_9 : f32 to vector<8x128xf32>
    %23 = arith.maximumf %19, %22 : vector<8x128xf32>
    %cst_10 = arith.constant 1.000000e+00 : f32
    %24 = vector.broadcast %cst_10 : f32 to vector<8x128xf32>
    %25 = arith.addf %24, %8 : vector<8x128xf32>
    %cst_11 = arith.constant 1.000000e+00 : f32
    %26 = vector.broadcast %cst_11 : f32 to vector<8x128xf32>
    %27 = arith.divf %26, %25 : vector<8x128xf32>
    %cst_12 = arith.constant 0.000000e+00 : f32
    %28 = vector.broadcast %cst_12 : f32 to vector<8x128xf32>
    %29 = arith.cmpf oge, %3, %28 : vector<8x128xf32>
    %30 = arith.mulf %8, %27 : vector<8x128xf32>
    %31 = arith.select %29, %27, %30 : vector<8x128xi1>, vector<8x128xf32>
    %32 = arith.mulf %4, %21 : vector<8x128xf32>
    %cst_13 = arith.constant 1.000000e+00 : f32
    %33 = vector.broadcast %cst_13 : f32 to vector<8x128xf32>
    %34 = arith.subf %33, %4 : vector<8x128xf32>
    %35 = arith.mulf %34, %23 : vector<8x128xf32>
    %36 = arith.addf %32, %35 : vector<8x128xf32>
    %cst_14 = arith.constant 0.000000e+00 : f32
    %37 = vector.broadcast %cst_14 : f32 to vector<8x128xf32>
    %38 = arith.subf %37, %36 : vector<8x128xf32>
    %c0_15 = arith.constant 0 : index
    %c0_16 = arith.constant 0 : index
    %c0_17 = arith.constant 0 : index
    %c0_18 = arith.constant 0 : index
    %39 = vector.load %arg4[%c0_15, %c0_16, %c0_17, %c0_18] : memref<1x4x8x128xf32, #tpu.memory_space<vmem>>, vector<1x1x8x128xf32>
    %40 = vector.shape_cast %39 : vector<1x1x8x128xf32> to vector<8x128xf32>
    %41 = vector.shape_cast %31 : vector<8x128xf32> to vector<1x8x128xf32>
    %cst_19 = arith.constant dense<0.000000e+00> : vector<8x128xf32>
    %42 = vector.multi_reduction <add>, %41, %cst_19 [0] : vector<1x8x128xf32> to vector<8x128xf32>
    %43 = arith.addf %40, %42 : vector<8x128xf32>
    %c0_20 = arith.constant 0 : index
    %c0_21 = arith.constant 0 : index
    %c0_22 = arith.constant 0 : index
    %c0_23 = arith.constant 0 : index
    %44 = vector.load %arg4[%c0_20, %c0_21, %c0_22, %c0_23] : memref<1x4x8x128xf32, #tpu.memory_space<vmem>>, vector<1x1x8x128xf32>
    %45 = vector.shape_cast %44 : vector<1x1x8x128xf32> to vector<8x128xf32>
    %46 = vector.shape_cast %43 : vector<8x128xf32> to vector<1x1x8x128xf32>
    tpu.vector_store %arg4[%c0_20, %c0_21, %c0_22, %c0_23], %46 {strides = array<i32>} : memref<1x4x8x128xf32, #tpu.memory_space<vmem>>, vector<1x1x8x128xf32>,
    %c0_24 = arith.constant 0 : index
    %c1 = arith.constant 1 : index
    %c0_25 = arith.constant 0 : index
    %c0_26 = arith.constant 0 : index
    %47 = vector.load %arg4[%c0_24, %c1, %c0_25, %c0_26] : memref<1x4x8x128xf32, #tpu.memory_space<vmem>>, vector<1x1x8x128xf32>
    %48 = vector.shape_cast %47 : vector<1x1x8x128xf32> to vector<8x128xf32>
    %49 = vector.shape_cast %4 : vector<8x128xf32> to vector<1x8x128xf32>
    %cst_27 = arith.constant dense<0.000000e+00> : vector<8x128xf32>
    %50 = vector.multi_reduction <add>, %49, %cst_27 [0] : vector<1x8x128xf32> to vector<8x128xf32>
    %51 = arith.addf %48, %50 : vector<8x128xf32>
    %c0_28 = arith.constant 0 : index
    %c1_29 = arith.constant 1 : index
    %c0_30 = arith.constant 0 : index
    %c0_31 = arith.constant 0 : index
    %52 = vector.load %arg4[%c0_28, %c1_29, %c0_30, %c0_31] : memref<1x4x8x128xf32, #tpu.memory_space<vmem>>, vector<1x1x8x128xf32>
    %53 = vector.shape_cast %52 : vector<1x1x8x128xf32> to vector<8x128xf32>
    %54 = vector.shape_cast %51 : vector<8x128xf32> to vector<1x1x8x128xf32>
    tpu.vector_store %arg4[%c0_28, %c1_29, %c0_30, %c0_31], %54 {strides = array<i32>} : memref<1x4x8x128xf32, #tpu.memory_space<vmem>>, vector<1x1x8x128xf32>,
    %c0_32 = arith.constant 0 : index
    %c2 = arith.constant 2 : index
    %c0_33 = arith.constant 0 : index
    %c0_34 = arith.constant 0 : index
    %55 = vector.load %arg4[%c0_32, %c2, %c0_33, %c0_34] : memref<1x4x8x128xf32, #tpu.memory_space<vmem>>, vector<1x1x8x128xf32>
    %56 = vector.shape_cast %55 : vector<1x1x8x128xf32> to vector<8x128xf32>
    %57 = arith.mulf %31, %4 : vector<8x128xf32>
    %58 = vector.shape_cast %57 : vector<8x128xf32> to vector<1x8x128xf32>
    %cst_35 = arith.constant dense<0.000000e+00> : vector<8x128xf32>
    %59 = vector.multi_reduction <add>, %58, %cst_35 [0] : vector<1x8x128xf32> to vector<8x128xf32>
    %60 = arith.addf %56, %59 : vector<8x128xf32>
    %c0_36 = arith.constant 0 : index
    %c2_37 = arith.constant 2 : index
    %c0_38 = arith.constant 0 : index
    %c0_39 = arith.constant 0 : index
    %61 = vector.load %arg4[%c0_36, %c2_37, %c0_38, %c0_39] : memref<1x4x8x128xf32, #tpu.memory_space<vmem>>, vector<1x1x8x128xf32>
    %62 = vector.shape_cast %61 : vector<1x1x8x128xf32> to vector<8x128xf32>
    %63 = vector.shape_cast %60 : vector<8x128xf32> to vector<1x1x8x128xf32>
    tpu.vector_store %arg4[%c0_36, %c2_37, %c0_38, %c0_39], %63 {strides = array<i32>} : memref<1x4x8x128xf32, #tpu.memory_space<vmem>>, vector<1x1x8x128xf32>,
    %c0_40 = arith.constant 0 : index
    %c3 = arith.constant 3 : index
    %c0_41 = arith.constant 0 : index
    %c0_42 = arith.constant 0 : index
    %64 = vector.load %arg4[%c0_40, %c3, %c0_41, %c0_42] : memref<1x4x8x128xf32, #tpu.memory_space<vmem>>, vector<1x1x8x128xf32>
    %65 = vector.shape_cast %64 : vector<1x1x8x128xf32> to vector<8x128xf32>
    %66 = vector.shape_cast %38 : vector<8x128xf32> to vector<1x8x128xf32>
    %cst_43 = arith.constant dense<0.000000e+00> : vector<8x128xf32>
    %67 = vector.multi_reduction <add>, %66, %cst_43 [0] : vector<1x8x128xf32> to vector<8x128xf32>
    %68 = arith.addf %65, %67 : vector<8x128xf32>
    %c0_44 = arith.constant 0 : index
    %c3_45 = arith.constant 3 : index
    %c0_46 = arith.constant 0 : index
    %c0_47 = arith.constant 0 : index
    %69 = vector.load %arg4[%c0_44, %c3_45, %c0_46, %c0_47] : memref<1x4x8x128xf32, #tpu.memory_space<vmem>>, vector<1x1x8x128xf32>
    %70 = vector.shape_cast %69 : vector<1x1x8x128xf32> to vector<8x128xf32>
    %71 = vector.shape_cast %68 : vector<8x128xf32> to vector<1x1x8x128xf32>
    tpu.vector_store %arg4[%c0_44, %c3_45, %c0_46, %c0_47], %71 {strides = array<i32>} : memref<1x4x8x128xf32, #tpu.memory_space<vmem>>, vector<1x1x8x128xf32>,
    return
  }
  func.func @transform_0(%arg0: i32, %arg1: i32) -> (i32, i32) {
    %c1_i32 = arith.constant 1 : i32
    %0 = arith.muli %arg0, %c1_i32 : i32
    %1 = arith.addi %0, %arg1 : i32
    %c0_i32 = arith.constant 0 : i32
    %c0_i32_0 = arith.constant 0 : i32
    return %1, %c0_i32 : i32, i32
  }
  func.func @transform_1(%arg0: i32, %arg1: i32) -> (i32, i32) {
    %c1_i32 = arith.constant 1 : i32
    %0 = arith.muli %arg0, %c1_i32 : i32
    %1 = arith.addi %0, %arg1 : i32
    %c0_i32 = arith.constant 0 : i32
    %c0_i32_0 = arith.constant 0 : i32
    return %1, %c0_i32 : i32, i32
  }
  func.func @transform_2(%arg0: i32, %arg1: i32) -> (i32, i32, i32, i32) {
    %c0_i32 = arith.constant 0 : i32
    %c0_i32_0 = arith.constant 0 : i32
    %c0_i32_1 = arith.constant 0 : i32
    %c0_i32_2 = arith.constant 0 : i32
    return %arg0, %c0_i32, %c0_i32_0, %c0_i32_1 : i32, i32, i32, i32
  }
}

</mosaic_0001>

<llo_original>
// kernel: tpu_custom_call.1
$region0: #{tpu_custom_call.1}
  #allocation0 [shape = 'u32[]', space=smem, size = 0x4, offset = 0x4, fixed_abs, tag = 'smem constant byte address 0x4 - core index']
  #allocation1 [shape = 'u32[144,128]{1,0:T(1,128)}', space=vmem, size = 0x12000, scoped, tag = 'internal scratch']
  %s0 = inlined_call_operand.hbm [shape: f32[16,128], index: 0, kind: input, shape index: {}]
  %s1 = inlined_call_operand.hbm [shape: f32[16,128], index: 1, kind: input, shape index: {}]
  %s2 = inlined_call_operand.hbm [shape: f32[2,4,8,128], index: 2, kind: output, shape index: {}]
  %s3 = sld [smem:[#allocation0]]
  $region53: #{tpu_custom_call.1} parent=0
    _
  %s5 = ssub.s32 1, %s3
  %s6 = scalar_select 0, %s5, %s3
  $region1: #{tpu_custom_call.1} parent=0
    #allocation2 [shape = 'u8[8192]{0}', space=vmem, size = 0x2000, scoped, tag = 'input window, operand 0']
    #allocation3 [shape = 's32[2]{0}', space=sflag, size = 0x8, scoped, tag = 'scoped memory for tpu_custom_call.1']
    #allocation4 [shape = 's32[2]{0}', space=sflag, size = 0x8, scoped, tag = 'scoped memory for tpu_custom_call.1']
    #allocation5 [shape = 'u8[8192]{0}', space=vmem, size = 0x2000, scoped, tag = 'input window, operand 1']
    #allocation6 [shape = 's32[2]{0}', space=sflag, size = 0x8, scoped, tag = 'scoped memory for tpu_custom_call.1']
    #allocation7 [shape = 'u8[32768]{0}', space=vmem, size = 0x8000, scoped, tag = 'output window, operand 0']
    %7 = vsyncpa [#allocation3], 0
    %s8 = scalar_lea.sflag [#allocation3], 1
    %9 = vsyncpa %s8, 0
    %10 = vsyncpa [#allocation6], 0
    %s11 = scalar_lea.sflag [#allocation6], 1
    %12 = vsyncpa %s11, 0
    %13 = vsyncpa [#allocation4], 0
    %s14 = scalar_lea.sflag [#allocation4], 1
    %15 = vsyncpa %s14, 0
    loop: start=0, step=1, limit=4
    $region2: #{tpu_custom_call.1} parent=1 // loop_pre_header
      _
    $region3: #{tpu_custom_call.1} parent=1 // loop_header
      %s17 = sphi 0, %s21
      %p18 = scmp.ge.s32.totalorder %s17, 4
      %s24 = sphi 0, %s36
      %s25 = sphi 0, %s32
      %s26 = sphi 0, %s24
      %s27 = sphi 0, %s25
      %s28 = sphi 0, %s26
      %s29 = sphi 0, %s27
      %s41 = sphi 0, %s43
      %s44 = sphi 0, %s41
      %s45 = sphi 0, %s44
      %s61 = sphi 0, %s45
      %s69 = sphi 0, %s71
      %s72 = sphi 0, %s69
      %s73 = sphi 0, %s72
      %s89 = sphi 0, %s73
      %s95 = sphi 0, %s97
      %s98 = sphi 0, %s95
      %s99 = sphi 0, %s98
      %s115 = sphi 0, %s99
    $region4: #{tpu_custom_call.1} parent=1 // loop_header_branch
      %20 = sbr.rel (%p18) target = $region8
    $region5: #{tpu_custom_call.1} parent=1 // loop_body
      %s22 = ssub.s32 %s17, 1
      %s23 = ssub.s32 %s17, 2
      %s30 = sadd.s32 1, %s25
      %p31 = scmp.ge.s32.totalorder %s30, 1
      %s32 = scalar_select %p31, 0, %s30
      %s33 = sadd.s32 1, %s24
      %s34 = scalar_select %p31, %s33, %s24
      %p35 = scmp.ge.s32.totalorder %s34, 2
      %s36 = scalar_select %p35, 0, %s34
      %s37 = sadd.s32 %s24, %s25
      %s38 = sadd.s32 %s36, %s32
      %s39 = ssub.s32 %s37, %s38
      %p40 = scmp.eq.s32.totalorder %s39, 0
      %s42 = sadd.s32 %s41, 1
      %s43 = scalar_select %p40, %s41, %s42
      %p46 = pneg %p40
      %p47 = scmp.eq.s32.totalorder %s17, 1
      %p48 = por %p46, %p47
      %p49 = scmp.ne.s32.totalorder %s41, %s44
      %p50 = scmp.eq.s32.totalorder %s17, 0
      %p51 = por %p49, %p50
      %p52 = scmp.ne.s32.totalorder %s41, %s44
      %p53 = scmp.eq.s32.totalorder %s22, 1
      %p54 = por %p52, %p53
      %p55 = scmp.ne.s32.totalorder %s44, %s45
      %p56 = scmp.eq.s32.totalorder %s22, 0
      %p57 = por %p55, %p56
      %p58 = scmp.ne.s32.totalorder %s44, %s45
      %p59 = scmp.eq.s32.totalorder %s23, 1
      %p60 = por %p58, %p59
      %p62 = scmp.ne.s32.totalorder %s45, %s61
      %p63 = scmp.eq.s32.totalorder %s23, 0
      %p64 = por %p62, %p63
      %s65 = sadd.s32 %s24, %s25
      %s66 = sadd.s32 %s36, %s32
      %s67 = ssub.s32 %s65, %s66
      %p68 = scmp.eq.s32.totalorder %s67, 0
      %s70 = sadd.s32 %s69, 1
      %s71 = scalar_select %p68, %s69, %s70
      %p74 = pneg %p68
      %p75 = scmp.eq.s32.totalorder %s17, 1
      %p76 = por %p74, %p75
      %p77 = scmp.ne.s32.totalorder %s69, %s72
      %p78 = scmp.eq.s32.totalorder %s17, 0
      %p79 = por %p77, %p78
      %p80 = scmp.ne.s32.totalorder %s69, %s72
      %p81 = scmp.eq.s32.totalorder %s22, 1
      %p82 = por %p80, %p81
      %p83 = scmp.ne.s32.totalorder %s72, %s73
      %p84 = scmp.eq.s32.totalorder %s22, 0
      %p85 = por %p83, %p84
      %p86 = scmp.ne.s32.totalorder %s72, %s73
      %p87 = scmp.eq.s32.totalorder %s23, 1
      %p88 = por %p86, %p87
      %p90 = scmp.ne.s32.totalorder %s73, %s89
      %p91 = scmp.eq.s32.totalorder %s23, 0
      %p92 = por %p90, %p91
      %s93 = ssub.s32 %s24, %s36
      %p94 = scmp.eq.s32.totalorder %s93, 0
      %s96 = sadd.s32 %s95, 1
      %s97 = scalar_select %p94, %s95, %s96
      %p100 = pneg %p94
      %p101 = scmp.eq.s32.totalorder %s17, 1
      %p102 = por %p100, %p101
      %p103 = scmp.ne.s32.totalorder %s95, %s98
      %p104 = scmp.eq.s32.totalorder %s17, 0
      %p105 = por %p103, %p104
      %p106 = scmp.ne.s32.totalorder %s95, %s98
      %p107 = scmp.eq.s32.totalorder %s22, 1
      %p108 = por %p106, %p107
      %p109 = scmp.ne.s32.totalorder %s98, %s99
      %p110 = scmp.eq.s32.totalorder %s22, 0
      %p111 = por %p109, %p110
      %p112 = scmp.ne.s32.totalorder %s98, %s99
      %p113 = scmp.eq.s32.totalorder %s23, 1
      %p114 = por %p112, %p113
      %p116 = scmp.ne.s32.totalorder %s99, %s115
      %p117 = scmp.eq.s32.totalorder %s23, 0
      %p118 = por %p116, %p117
      %p119 = scmp.le.s32.totalorder 1, %s17
      %p120 = scmp.lt.s32.totalorder %s17, 3
      %p121 = pnand %p119, %p120
      %p122 = pneg %p121
      // Predicated region
      $region9: #{tpu_custom_call.1} parent=5 // pred_check
        _
      $region10: #{tpu_custom_call.1} parent=5 // pred_check_branch
        %124 = sbr.rel (%p121) target = $region12
      $region11: #{tpu_custom_call.1} parent=5 // pred_region
        %s125 = ssub.s32 %s17, 1
      $region12: #{tpu_custom_call.1} parent=5 // pred_fallthru
        _
      %p126 = scmp.lt.s32.totalorder %s17, 2
      // Predicated region
      $region13: #{tpu_custom_call.1} parent=5 // pred_check
        %p127 = pneg %p126
      $region14: #{tpu_custom_call.1} parent=5 // pred_check_branch
        %129 = sbr.rel (%p127) target = $region16
      $region15: #{tpu_custom_call.1} parent=5 // pred_region
        // Predicated region
        $region17: #{tpu_custom_call.1} parent=15 // pred_check
          %p130 = pneg %p51
        $region18: #{tpu_custom_call.1} parent=15 // pred_check_branch
          %132 = sbr.rel (%p130) target = $region20
        $region19: #{tpu_custom_call.1} parent=15 // pred_region
          %s133 = sand.u32 %s41, 1
          %s134 = scalar_lea.sflag [#allocation3], %s133
          %s135 = sand.u32 %s41, 1
          %s136 = smul.addr %s135, 8
          %s137 = scalar_lea.vmem [#allocation2], %s136
          %s138 = sadd.s32 %s24, %s25
          %s140 = ssub.s32 128, 128
          %141 = vsyncadd %s134, %s140
          %s142 = smul.addr %s138, 128
          %s143 = scalar_lea.hbm %s0, %s142
          %s145 = sshll.u32 %s137, 4
          %s146 = int_to_ptr.vmem [resolvable:$true] %s145
          %148 = dma.hbm_to_vmem [thread:$0]  %s143, 128, %s146, %s134
        $region20: #{tpu_custom_call.1} parent=15 // pred_fallthru
          _
        // Predicated region
        $region21: #{tpu_custom_call.1} parent=15 // pred_check
          %p149 = pneg %p79
        $region22: #{tpu_custom_call.1} parent=15 // pred_check_branch
          %151 = sbr.rel (%p149) target = $region24
        $region23: #{tpu_custom_call.1} parent=15 // pred_region
          %s152 = sand.u32 %s69, 1
          %s153 = scalar_lea.sflag [#allocation6], %s152
          %s154 = sand.u32 %s69, 1
          %s155 = smul.addr %s154, 8
          %s156 = scalar_lea.vmem [#allocation5], %s155
          %s157 = sadd.s32 %s24, %s25
          %s159 = ssub.s32 128, 128
          %160 = vsyncadd %s153, %s159
          %s161 = smul.addr %s157, 128
          %s162 = scalar_lea.hbm %s1, %s161
          %s164 = sshll.u32 %s156, 4
          %s165 = int_to_ptr.vmem [resolvable:$true] %s164
          %167 = dma.hbm_to_vmem [thread:$0]  %s162, 128, %s165, %s153
        $region24: #{tpu_custom_call.1} parent=15 // pred_fallthru
          _
      $region16: #{tpu_custom_call.1} parent=5 // pred_fallthru
        _
      %p168 = scmp.le.s32.totalorder 1, %s17
      %p169 = scmp.lt.s32.totalorder %s17, 3
      %p170 = pnand %p168, %p169
      %p171 = pneg %p170
      // Predicated region
      $region25: #{tpu_custom_call.1} parent=5 // pred_check
        _
      $region26: #{tpu_custom_call.1} parent=5 // pred_check_branch
        %173 = sbr.rel (%p170) target = $region28
      $region27: #{tpu_custom_call.1} parent=5 // pred_region
        %s174 = ssub.s32 %s17, 1
        %s175 = sand.u32 %s44, 1
        %s176 = scalar_lea.sflag [#allocation3], %s175
        %s177 = sand.u32 %s44, 1
        %s178 = smul.addr %s177, 8
        %s179 = scalar_lea.vmem [#allocation2], %s178
        // Predicated region
        $region29: #{tpu_custom_call.1} parent=27 // pred_check
          %p180 = pneg %p57
        $region30: #{tpu_custom_call.1} parent=27 // pred_check_branch
          %182 = sbr.rel (%p180) target = $region32
        $region31: #{tpu_custom_call.1} parent=27 // pred_region
          %183 = dma.done %s176, 128
        $region32: #{tpu_custom_call.1} parent=27 // pred_fallthru
          _
        %s184 = sand.u32 %s72, 1
        %s185 = scalar_lea.sflag [#allocation6], %s184
        %s186 = sand.u32 %s72, 1
        %s187 = smul.addr %s186, 8
        %s188 = scalar_lea.vmem [#allocation5], %s187
        // Predicated region
        $region33: #{tpu_custom_call.1} parent=27 // pred_check
          %p189 = pneg %p85
        $region34: #{tpu_custom_call.1} parent=27 // pred_check_branch
          %191 = sbr.rel (%p189) target = $region36
        $region35: #{tpu_custom_call.1} parent=27 // pred_region
          %192 = dma.done %s185, 128
        $region36: #{tpu_custom_call.1} parent=27 // pred_fallthru
          _
        %s193 = sand.u32 %s44, 1
        %s194 = scalar_lea.sflag [#allocation3], %s193
        %s195 = sand.u32 %s44, 1
        %s196 = smul.addr %s195, 8
        %s197 = scalar_lea.vmem [#allocation2], %s196
        %p198 = pneg %p57
        %p199 = pneg %p54
        %s200 = sand.u32 %s72, 1
        %s201 = scalar_lea.sflag [#allocation6], %s200
        %s202 = sand.u32 %s72, 1
        %s203 = smul.addr %s202, 8
        %s204 = scalar_lea.vmem [#allocation5], %s203
        %p205 = pneg %p85
        %p206 = pneg %p82
        %p207 = pneg %p111
        %p208 = pneg %p108
        %s209 = sand.u32 %s98, 1
        %s210 = scalar_lea.sflag [#allocation4], %s209
        %s211 = sand.u32 %s98, 1
        %s212 = smul.addr %s211, 32
        %s213 = scalar_lea.vmem [#allocation7], %s212
        %s214 = sadd.s32 %s26, %s27
        %s215 = sadd.s32 %s26, %s27
        %p216 = scmp.eq.s32.totalorder %s27, 0
        // Predicated region
        $region37: #{tpu_custom_call.1} parent=27 // pred_check
          %p217 = pneg %p216
        $region38: #{tpu_custom_call.1} parent=27 // pred_check_branch
          %219 = sbr.rel (%p217) target = $region40
        $region39: #{tpu_custom_call.1} parent=27 // pred_region
          %220 = vst [vmem:[%s213] sm:$0xff] 0.0
          %221 = vst [vmem:[%s213 + $0x8] sm:$0xff] 0.0
          %222 = vst [vmem:[%s213 + $0x10] sm:$0xff] 0.0
          %223 = vst [vmem:[%s213 + $0x18] sm:$0xff] 0.0
        $region40: #{tpu_custom_call.1} parent=27 // pred_fallthru
          _
        %v224 = vld [vmem:[%s179] sm:$0xff]
        %v225 = vld [vmem:[%s188] sm:$0xff]
        %v226 = vand.u32 2147483647, %v224
        %v227 = vsub.f32 0.0, %v226
        %v228 = vmul.f32 %v227, 1.442695
        %v229 = vpow.pop %v228
        %v230 = vadd.f32 %v229, 1.0
        %v231 = vlog2.pop %v230
        %v232 = vmul.f32 %v231, 0.6931472
        %v233 = vmin.f32 %v224, 0.0
        %v234 = vsub.f32 %v233, %v232
        %v235 = vmax.f32 %v224, 0.0
        %v236 = vsub.f32 0.0, %v235
        %v237 = vsub.f32 %v236, %v232
        %v238 = vmax.f32 %v234, -100.0
        %v239 = vmax.f32 %v237, -100.0
        %v240 = vrcp.pop %v230
        %v241 = vmul.f32 1.0, %v240
        %vm242 = vcmp.ge.f32.partialorder %v224, 0.0
        %v243 = vmul.f32 %v229, %v241
        %v244 = vsel %vm242, %v241, %v243
        %v245 = vmul.f32 %v225, %v238
        %v246 = vsub.f32 1.0, %v225
        %v247 = vmul.f32 %v246, %v239
        %v248 = vadd.f32 %v245, %v247
        %v249 = vsub.f32 0.0, %v248
        %v250 = vld [vmem:[%s213] sm:$0xff]
        %v251 = vadd.f32 %v244, 0.0
        %v252 = vadd.f32 %v250, %v251
        %253 = vst [vmem:[%s213] sm:$0xff] %v252
        %s254 = scalar_lea.vmem %s213, 8 [#allocation7]
        %v255 = vld [vmem:[%s254] sm:$0xff]
        %v256 = vadd.f32 %v225, 0.0
        %v257 = vadd.f32 %v255, %v256
        %258 = vst [vmem:[%s254] sm:$0xff] %v257
        %s259 = scalar_lea.vmem %s213, 16 [#allocation7]
        %v260 = vld [vmem:[%s259] sm:$0xff]
        %v261 = vmul.f32 %v244, %v225
        %v262 = vadd.f32 %v261, 0.0
        %v263 = vadd.f32 %v260, %v262
        %264 = vst [vmem:[%s259] sm:$0xff] %v263
        %s265 = scalar_lea.vmem %s213, 24 [#allocation7]
        %v266 = vld [vmem:[%s265] sm:$0xff]
        %v267 = vadd.f32 %v249, 0.0
        %v268 = vadd.f32 %v266, %v267
        %269 = vst [vmem:[%s265] sm:$0xff] %v268
        %s270 = sand.u32 %s98, 1
        %s271 = scalar_lea.sflag [#allocation4], %s270
        %s272 = sand.u32 %s98, 1
        %s273 = smul.addr %s272, 32
        %s274 = scalar_lea.vmem [#allocation7], %s273
        // Predicated region
        $region41: #{tpu_custom_call.1} parent=27 // pred_check
          %p275 = pneg %p108
        $region42: #{tpu_custom_call.1} parent=27 // pred_check_branch
          %277 = sbr.rel (%p275) target = $region44
        $region43: #{tpu_custom_call.1} parent=27 // pred_region
          %s279 = ssub.s32 512, 512
          %280 = vsyncadd %s271, %s279
          %s281 = smul.addr %s26, 4
          %s282 = smul.addr %s281, 128
          %s283 = scalar_lea.hbm %s2, %s282
          %s284 = sshll.u32 %s274, 4
          %s285 = int_to_ptr.vmem [resolvable:$true] %s284
          %290 = dma.vmem_to_hbm [thread:$0]  %s285, 512, %s283, %s271, 128, 128, 8
        $region44: #{tpu_custom_call.1} parent=27 // pred_fallthru
          _
      $region28: #{tpu_custom_call.1} parent=5 // pred_fallthru
        _
      %p291 = scmp.le.s32.totalorder 2, %s17
      // Predicated region
      $region45: #{tpu_custom_call.1} parent=5 // pred_check
        %p292 = pneg %p291
      $region46: #{tpu_custom_call.1} parent=5 // pred_check_branch
        %294 = sbr.rel (%p292) target = $region48
      $region47: #{tpu_custom_call.1} parent=5 // pred_region
        %s295 = ssub.s32 %s17, 2
        // Predicated region
        $region49: #{tpu_custom_call.1} parent=47 // pred_check
          %p296 = pneg %p114
        $region50: #{tpu_custom_call.1} parent=47 // pred_check_branch
          %298 = sbr.rel (%p296) target = $region52
        $region51: #{tpu_custom_call.1} parent=47 // pred_region
          %s299 = sand.u32 %s99, 1
          %s300 = scalar_lea.sflag [#allocation4], %s299
          %s301 = sand.u32 %s99, 1
          %s302 = smul.addr %s301, 32
          %s303 = scalar_lea.vmem [#allocation7], %s302
          %304 = dma.done %s300, 512
        $region52: #{tpu_custom_call.1} parent=47 // pred_fallthru
          _
      $region48: #{tpu_custom_call.1} parent=5 // pred_fallthru
        _
    $region6: #{tpu_custom_call.1} parent=1 // loop_footer
      %s21 = sadd.s32 1, %s17
    $region7: #{tpu_custom_call.1} parent=1 // loop_footer_branch
      %16 = sbr.rel target = $region3
    $region8: #{tpu_custom_call.1} parent=1 // loop_exit
      _
    %305 = vsyncpa [#allocation3], 1
    %s306 = scalar_lea.sflag [#allocation3], 1
    %307 = vsyncpa %s306, 1
    %308 = vsyncpa [#allocation6], 1
    %s309 = scalar_lea.sflag [#allocation6], 1
    %310 = vsyncpa %s309, 1
    %311 = vsyncpa [#allocation4], 1
    %s312 = scalar_lea.sflag [#allocation4], 1
    %313 = vsyncpa %s312, 1

</llo_original>
